<compile_context>
chip_gen: v7x
topology: tpu7x:2x2x1
jax: 0.10.0
libtpu: 0.0.40
codegen_flags: <defaults>
</compile_context>

<pallas_src>
import jax
import jax.numpy as jnp
from jax.experimental import pallas as pl
from jax.experimental.pallas import tpu as pltpu

N_EMBD = 384          # `n_embd` in the PyTorch module
BLOCK_SIZE = 256      # upper bound on T
LANE = 128            # padded head dim (lane-dense slices / stores)


def head_kernel(x_ref, w_ref, o_ref):
    # x_ref: (bb, T, C)      bf16 block of the input batch
    # w_ref: (C, 3*Dp)       fused bf16 [Wq*scale | Wk | Wv], zero-padded to Dp lanes
    # o_ref: (bb, T, Dp)     lane-dense output (wrapper slices back to head_size)
    bb, T, C = x_ref.shape
    Dp3 = w_ref.shape[1]
    Dp = Dp3 // 3

    # --- fused QKV projection: one (bb*T, C) x (C, 3*Dp) bf16 MXU matmul -----
    x2d = x_ref[...].reshape(bb * T, C)                              # bf16, no cast
    qkv = jnp.dot(x2d, w_ref[...], preferred_element_type=jnp.float32)
    qkv = qkv.astype(jnp.bfloat16).reshape(bb, T, Dp3)               # single cast

    # 128-lane-aligned slices (no relayout copies)
    q = qkv[:, :, 0 * Dp:1 * Dp]          # already pre-scaled by C**-0.5
    k = qkv[:, :, 1 * Dp:2 * Dp]
    v = qkv[:, :, 2 * Dp:3 * Dp]

    # --- scores: contraction over head dim, no explicit transpose -----------
    s = jnp.einsum('bqd,bkd->bqk', q, k,
                   preferred_element_type=jnp.float32)               # (bb, T, T) f32

    # --- causal mask, generated in-kernel (cheap VPU filler, no DMA) --------
    row = jax.lax.broadcasted_iota(jnp.int32, (T, T), 0)
    col = jax.lax.broadcasted_iota(jnp.int32, (T, T), 1)
    s = jnp.where((col <= row)[None, :, :], s, jnp.float32(-1e30))

    # --- softmax with deferred normalization --------------------------------
    m = jnp.max(s, axis=-1, keepdims=True)
    p = jnp.exp(s - m)                                               # <= 1, bf16-safe
    denom = jnp.sum(p, axis=-1, keepdims=True)                       # (bb, T, 1)

    # Dropout is identity in eval mode.

    # --- weighted aggregation, then normalize on the small (bb,T,Dp) tensor -
    o = jnp.einsum('bqk,bkd->bqd', p.astype(jnp.bfloat16), v,
                   preferred_element_type=jnp.float32)               # (bb, T, Dp)
    o = o * pl.reciprocal(denom, approx=True)                        # EUP slot
    o_ref[...] = o.astype(o_ref.dtype)


def head_forward(x, wk, wq, wv, *, batch_block=8):
    """x: (B, T, C), wk/wq/wv: (C, H) (i.e. torch W.T).  Returns (B, T, H)."""
    B, T, C = x.shape
    H = wk.shape[1]
    assert C == N_EMBD and T <= BLOCK_SIZE

    # Padded head dim: round H up to a multiple of 128 lanes.
    Dp = ((H + LANE - 1) // LANE) * LANE

    # Fold the C**-0.5 scale into Wq (one-time, constant-folded under jit).
    scale = jnp.asarray(C, jnp.float32) ** jnp.float32(-0.5)
    wq_s = wq.astype(jnp.float32) * scale

    def pad_cols(w):
        return jnp.pad(w, ((0, 0), (0, Dp - H))) if Dp != H else w

    # Fused (C, 3*Dp) bf16 weight: zero pad columns don't change q·k or p·v.
    w_qkv = jnp.concatenate(
        [pad_cols(wq_s), pad_cols(wk), pad_cols(wv)], axis=1
    ).astype(jnp.bfloat16)

    # bf16 activations halve the dominant HBM read. (Ideally the caller passes
    # bf16 directly / the cast fuses into the producer; this is an explicit cast.)
    x_bf = x.astype(jnp.bfloat16)

    # Batch block: keep >= 4 grid steps when B >= 4 so each v7x TensorCore
    # gets >= 2 pipelined iterations; keep batch_block modest (<= ~16 at T=256)
    # so double-buffered x + f32 score intermediates fit v7x's scoped VMEM.
    bb = min(batch_block, B)
    if B >= 4:
        bb = min(bb, B // 4)
    elif B >= 2:
        bb = min(bb, B // 2)
    while B % bb != 0:
        bb -= 1
    grid_b = B // bb

    out_padded = pl.pallas_call(
        head_kernel,
        out_shape=jax.ShapeDtypeStruct((B, T, Dp), x.dtype),
        grid_spec=pltpu.PrefetchScalarGridSpec(
            num_scalar_prefetch=0,
            grid=(grid_b,),
            in_specs=[
                pl.BlockSpec((bb, T, C), lambda b: (b, 0, 0)),
                pl.BlockSpec((C, 3 * Dp), lambda b: (0, 0)),   # batch-invariant
            ],
            out_specs=pl.BlockSpec((bb, T, Dp), lambda b: (b, 0, 0)),
        ),
        compiler_params=pltpu.CompilerParams(
            dimension_semantics=("parallel",),
        ),
    )(x_bf, w_qkv)

    return out_padded[:, :, :H]


def head_reference(x, wk, wq, wv):
    """Pure-JAX f32 reference mirroring the PyTorch forward (eval mode)."""
    B, T, C = x.shape
    k = x @ wk
    q = x @ wq
    v = x @ wv
    wei = (q @ jnp.swapaxes(k, -2, -1)) * (C ** -0.5)
    mask = jnp.tril(jnp.ones((T, T), dtype=bool))
    wei = jnp.where(mask, wei, -jnp.inf)
    wei = jax.nn.softmax(wei, axis=-1)
    return wei @ v


if __name__ == "__main__":
    key = jax.random.PRNGKey(0)
    k_x, k_wk, k_wq, k_wv = jax.random.split(key, 4)

    B, T, C = 2, 16, N_EMBD
    head_size = 64

    x = jax.random.normal(k_x, (B, T, C), dtype=jnp.float32)
    # PyTorch stores (head_size, n_embd); we store the transpose (n_embd, head_size).
    wk = jax.random.normal(k_wk, (C, head_size), dtype=jnp.float32) * 0.02
    wq = jax.random.normal(k_wq, (C, head_size), dtype=jnp.float32) * 0.02
    wv = jax.random.normal(k_wv, (C, head_size), dtype=jnp.float32) * 0.02

    out = head_forward(x, wk, wq, wv)
    out = jax.block_until_ready(out)

    ref = head_reference(x, wk, wq, wv)
    assert out.shape == (B, T, head_size)
    # bf16 activations + bf16 MXU inputs (f32 accumulation) -> loose tolerance.
    assert jnp.allclose(out, ref, atol=2e-2, rtol=2e-2), "mismatch vs reference"

    print("KERNEL_OK")
</pallas_src>

<mosaic_0001>
module attributes {stable_mosaic.version = 11 : i64} {
  func.func @head_kernel(%arg0: i32, %arg1: memref<1x16x384xbf16, #tpu.memory_space<vmem>>, %arg2: memref<384x384xbf16, #tpu.memory_space<vmem>>, %arg3: memref<1x16x128xf32, #tpu.memory_space<vmem>>) attributes {dimension_semantics = [#tpu.dimension_semantics<parallel>], iteration_bounds = array<i64: 2>, scalar_prefetch = 0 : i64, scratch_operands = 0 : i64, tpu.core_type = #tpu.core_type<tc>, window_params = [{transform_indices = @transform_0, window_bounds = array<i64: 1, 16, 384>}, {pipeline_mode = #tpu.pipeline_mode<synchronous>, transform_indices = @transform_1, window_bounds = array<i64: 384, 384>}, {transform_indices = @transform_2, window_bounds = array<i64: 1, 16, 128>}]} {
    %c0 = arith.constant 0 : index
    %c0_0 = arith.constant 0 : index
    %c0_1 = arith.constant 0 : index
    %0 = vector.load %arg1[%c0, %c0_0, %c0_1] : memref<1x16x384xbf16, #tpu.memory_space<vmem>>, vector<1x16x384xbf16>
    %1 = vector.shape_cast %0 : vector<1x16x384xbf16> to vector<16x384xbf16>
    %c0_2 = arith.constant 0 : index
    %c0_3 = arith.constant 0 : index
    %2 = vector.load %arg2[%c0_2, %c0_3] : memref<384x384xbf16, #tpu.memory_space<vmem>>, vector<384x384xbf16>
    %cst = arith.constant dense<0.000000e+00> : vector<16x384xf32>
    %3 = tpu.matmul %1, %2, %cst {dimension_numbers = #tpu.dot_dimension_numbers<[1], [0], [0], [1], [0, 0, 1, 1], [], []>} : vector<16x384xbf16>, vector<384x384xbf16>, vector<16x384xf32> -> vector<16x384xf32>
    %4 = arith.truncf %3 : vector<16x384xf32> to vector<16x384xbf16>
    %5 = vector.shape_cast %4 : vector<16x384xbf16> to vector<1x16x384xbf16>
    %6 = vector.extract_strided_slice %5 {offsets = [0, 0, 0], sizes = [1, 16, 128], strides = [1, 1, 1]} : vector<1x16x384xbf16> to vector<1x16x128xbf16>
    %7 = vector.extract_strided_slice %5 {offsets = [0, 0, 128], sizes = [1, 16, 128], strides = [1, 1, 1]} : vector<1x16x384xbf16> to vector<1x16x128xbf16>
    %8 = vector.extract_strided_slice %5 {offsets = [0, 0, 256], sizes = [1, 16, 128], strides = [1, 1, 1]} : vector<1x16x384xbf16> to vector<1x16x128xbf16>
    "tpu.trace_start"() <{level = 10 : i32, message = "bqd,bkd->bqk"}> : () -> ()
    %cst_4 = arith.constant dense<0.000000e+00> : vector<1x16x16xf32>
    %9 = tpu.matmul %6, %7, %cst_4 {dimension_numbers = #tpu.dot_dimension_numbers<[2], [2], [1], [1], [0, 0, 0, 1, 1, 1], [0], [0]>} : vector<1x16x128xbf16>, vector<1x16x128xbf16>, vector<1x16x16xf32> -> vector<1x16x16xf32>
    "tpu.trace_stop"() : () -> ()
    %10 = tpu.iota {dimensions = array<i32: 0>} : vector<16x16xi32>
    %11 = tpu.iota {dimensions = array<i32: 1>} : vector<16x16xi32>
    %12 = arith.cmpi sle, %11, %10 : vector<16x16xi32>
    %13 = vector.shape_cast %12 : vector<16x16xi1> to vector<1x16x16xi1>
    %cst_5 = arith.constant -1.000000e+30 : f32
    %14 = vector.broadcast %cst_5 : f32 to vector<1x16x16xf32>
    %15 = arith.select %13, %9, %14 : vector<1x16x16xi1>, vector<1x16x16xf32>
    %cst_6 = arith.constant dense<0xFF800000> : vector<1x16xf32>
    %16 = vector.multi_reduction <maximumf>, %15, %cst_6 [2] : vector<1x16x16xf32> to vector<1x16xf32>
    %17 = vector.shape_cast %16 : vector<1x16xf32> to vector<1x16x1xf32>
    %18 = vector.broadcast %17 : vector<1x16x1xf32> to vector<1x16x16xf32>
    %19 = arith.subf %15, %18 : vector<1x16x16xf32>
    %20 = math.exp %19 : vector<1x16x16xf32>
    %cst_7 = arith.constant dense<0.000000e+00> : vector<1x16xf32>
    %21 = vector.multi_reduction <add>, %20, %cst_7 [2] : vector<1x16x16xf32> to vector<1x16xf32>
    %22 = vector.shape_cast %21 : vector<1x16xf32> to vector<1x16x1xf32>
    %23 = arith.truncf %20 : vector<1x16x16xf32> to vector<1x16x16xbf16>
    "tpu.trace_start"() <{level = 10 : i32, message = "bqk,bkd->bqd"}> : () -> ()
    %cst_8 = arith.constant dense<0.000000e+00> : vector<1x16x128xf32>
    %24 = tpu.matmul %23, %8, %cst_8 {dimension_numbers = #tpu.dot_dimension_numbers<[2], [1], [1], [2], [0, 0, 0, 1, 1, 2], [0], [0]>} : vector<1x16x16xbf16>, vector<1x16x128xbf16>, vector<1x16x128xf32> -> vector<1x16x128xf32>
    "tpu.trace_stop"() : () -> ()
    %25 = tpu.reciprocal %22 {approx = true} : vector<1x16x1xf32> -> vector<1x16x1xf32>
    %26 = vector.broadcast %25 : vector<1x16x1xf32> to vector<1x16x128xf32>
    %27 = arith.mulf %24, %26 : vector<1x16x128xf32>
    %c0_9 = arith.constant 0 : index
    %c0_10 = arith.constant 0 : index
    %c0_11 = arith.constant 0 : index
    %28 = vector.load %arg3[%c0_9, %c0_10, %c0_11] : memref<1x16x128xf32, #tpu.memory_space<vmem>>, vector<1x16x128xf32>
    tpu.vector_store %arg3[%c0_9, %c0_10, %c0_11], %27 {strides = array<i32>} : memref<1x16x128xf32, #tpu.memory_space<vmem>>, vector<1x16x128xf32>,
    return
  }
  func.func @transform_0(%arg0: i32) -> (i32, i32, i32) {
    %c0_i32 = arith.constant 0 : i32
    %c0_i32_0 = arith.constant 0 : i32
    %c0_i32_1 = arith.constant 0 : i32
    return %arg0, %c0_i32, %c0_i32_0 : i32, i32, i32
  }
  func.func @transform_1(%arg0: i32) -> (i32, i32) {
    %c0_i32 = arith.constant 0 : i32
    %c0_i32_0 = arith.constant 0 : i32
    %c0_i32_1 = arith.constant 0 : i32
    return %c0_i32, %c0_i32_0 : i32, i32
  }
  func.func @transform_2(%arg0: i32) -> (i32, i32, i32) {
    %c0_i32 = arith.constant 0 : i32
    %c0_i32_0 = arith.constant 0 : i32
    %c0_i32_1 = arith.constant 0 : i32
    return %arg0, %c0_i32, %c0_i32_0 : i32, i32, i32
  }
}

</mosaic_0001>

<llo_original>
// kernel: tpu_custom_call.1
$region0: #{tpu_custom_call.1}
  #allocation0 [shape = 'u32[]', space=smem, size = 0x4, offset = 0x4, fixed_abs, tag = 'smem constant byte address 0x4 - core index']
  #allocation1 [shape = 'u32[144,128]{1,0:T(1,128)}', space=vmem, size = 0x12000, scoped, tag = 'internal scratch']
  %s0 = inlined_call_operand.hbm [shape: bf16[2,16,384], index: 0, kind: input, shape index: {}]
  %s1 = inlined_call_operand.hbm [shape: bf16[384,384], index: 1, kind: input, shape index: {}]
  %s2 = inlined_call_operand.hbm [shape: f32[2,16,128], index: 2, kind: output, shape index: {}]
  %s3 = sld [smem:[#allocation0]]
  $region49: #{tpu_custom_call.1} parent=0
    _
  %s5 = ssub.s32 1, %s3
  %s6 = scalar_select 0, %s5, %s3
  $region1: #{tpu_custom_call.1} parent=0
    #allocation2 [shape = 'u8[24576]{0}', space=vmem, size = 0x6000, scoped, tag = 'input window, operand 0']
    #allocation3 [shape = 's32[2]{0}', space=sflag, size = 0x8, scoped, tag = 'scoped memory for tpu_custom_call.1']
    #allocation4 [shape = 's32[2]{0}', space=sflag, size = 0x8, scoped, tag = 'scoped memory for tpu_custom_call.1']
    #allocation5 [shape = 'u8[294912]{0}', space=vmem, size = 0x48000, scoped, tag = 'input window, operand 1, single buffered']
    #allocation6 [shape = 's32[1]{0}', space=sflag, size = 0x4, scoped, tag = 'scoped memory for tpu_custom_call.1']
    #allocation7 [shape = 'u8[16384]{0}', space=vmem, size = 0x4000, scoped, tag = 'output window, operand 0']
    %7 = vsyncpa [#allocation3], 0
    %s8 = scalar_lea.sflag [#allocation3], 1
    %9 = vsyncpa %s8, 0
    %10 = vsyncpa [#allocation6], 0
    %11 = vsyncpa [#allocation4], 0
    %s12 = scalar_lea.sflag [#allocation4], 1
    %13 = vsyncpa %s12, 0
    loop: start=0, step=1, limit=4
    $region2: #{tpu_custom_call.1} parent=1 // loop_pre_header
      _
    $region3: #{tpu_custom_call.1} parent=1 // loop_header
      %s15 = sphi 0, %s19
      %p16 = scmp.ge.s32.totalorder %s15, 4
      %s25 = sphi 0, %s27
      %s28 = sphi 0, %s25
      %s29 = sphi 0, %s28
      %s45 = sphi 0, %s29
      %s49 = sphi 0, %s49
      %s51 = sphi 0, %s49
      %s52 = sphi 0, %s51
      %s66 = sphi 0, %s52
      %s72 = sphi 0, %s74
      %s75 = sphi 0, %s72
      %s76 = sphi 0, %s75
      %s92 = sphi 0, %s76
    $region4: #{tpu_custom_call.1} parent=1 // loop_header_branch
      %18 = sbr.rel (%p16) target = $region8
    $region5: #{tpu_custom_call.1} parent=1 // loop_body
      %s20 = ssub.s32 %s15, 1
      %s21 = ssub.s32 %s15, 2
      %s22 = sadd.s32 %s15, 1
      %s23 = ssub.s32 %s15, %s22
      %p24 = scmp.eq.s32.totalorder %s23, 0
      %s26 = sadd.s32 %s25, 1
      %s27 = scalar_select %p24, %s25, %s26
      %p30 = pneg %p24
      %p31 = scmp.eq.s32.totalorder %s15, 1
      %p32 = por %p30, %p31
      %p33 = scmp.ne.s32.totalorder %s25, %s28
      %p34 = scmp.eq.s32.totalorder %s15, 0
      %p35 = por %p33, %p34
      %p36 = scmp.ne.s32.totalorder %s25, %s28
      %p37 = scmp.eq.s32.totalorder %s20, 1
      %p38 = por %p36, %p37
      %p39 = scmp.ne.s32.totalorder %s28, %s29
      %p40 = scmp.eq.s32.totalorder %s20, 0
      %p41 = por %p39, %p40
      %p42 = scmp.ne.s32.totalorder %s28, %s29
      %p43 = scmp.eq.s32.totalorder %s21, 1
      %p44 = por %p42, %p43
      %p46 = scmp.ne.s32.totalorder %s29, %s45
      %p47 = scmp.eq.s32.totalorder %s21, 0
      %p48 = por %p46, %p47
      %s50 = sadd.s32 %s49, 1
      %p53 = scmp.eq.s32.totalorder %s15, 1
      %p54 = scmp.ne.s32.totalorder %s49, %s51
      %p55 = scmp.eq.s32.totalorder %s15, 0
      %p56 = por %p54, %p55
      %p57 = scmp.ne.s32.totalorder %s49, %s51
      %p58 = scmp.eq.s32.totalorder %s20, 1
      %p59 = por %p57, %p58
      %p60 = scmp.ne.s32.totalorder %s51, %s52
      %p61 = scmp.eq.s32.totalorder %s20, 0
      %p62 = por %p60, %p61
      %p63 = scmp.ne.s32.totalorder %s51, %s52
      %p64 = scmp.eq.s32.totalorder %s21, 1
      %p65 = por %p63, %p64
      %p67 = scmp.ne.s32.totalorder %s52, %s66
      %p68 = scmp.eq.s32.totalorder %s21, 0
      %p69 = por %p67, %p68
      %s70 = ssub.s32 %s15, %s22
      %p71 = scmp.eq.s32.totalorder %s70, 0
      %s73 = sadd.s32 %s72, 1
      %s74 = scalar_select %p71, %s72, %s73
      %p77 = pneg %p71
      %p78 = scmp.eq.s32.totalorder %s15, 1
      %p79 = por %p77, %p78
      %p80 = scmp.ne.s32.totalorder %s72, %s75
      %p81 = scmp.eq.s32.totalorder %s15, 0
      %p82 = por %p80, %p81
      %p83 = scmp.ne.s32.totalorder %s72, %s75
      %p84 = scmp.eq.s32.totalorder %s20, 1
      %p85 = por %p83, %p84
      %p86 = scmp.ne.s32.totalorder %s75, %s76
      %p87 = scmp.eq.s32.totalorder %s20, 0
      %p88 = por %p86, %p87
      %p89 = scmp.ne.s32.totalorder %s75, %s76
      %p90 = scmp.eq.s32.totalorder %s21, 1
      %p91 = por %p89, %p90
      %p93 = scmp.ne.s32.totalorder %s76, %s92
      %p94 = scmp.eq.s32.totalorder %s21, 0
      %p95 = por %p93, %p94
      %p96 = scmp.le.s32.totalorder 1, %s15
      %p97 = scmp.lt.s32.totalorder %s15, 3
      %p98 = pnand %p96, %p97
      %p99 = pneg %p98
      // Predicated region
      $region9: #{tpu_custom_call.1} parent=5 // pred_check
        _
      $region10: #{tpu_custom_call.1} parent=5 // pred_check_branch
        %101 = sbr.rel (%p98) target = $region12
      $region11: #{tpu_custom_call.1} parent=5 // pred_region
        %s102 = ssub.s32 %s15, 1
        // Predicated region
        $region13: #{tpu_custom_call.1} parent=11 // pred_check
          %p103 = pneg %p62
        $region14: #{tpu_custom_call.1} parent=11 // pred_check_branch
          %105 = sbr.rel (%p103) target = $region16
        $region15: #{tpu_custom_call.1} parent=11 // pred_region
          %s107 = ssub.s32 9216, 9216
          %108 = vsyncadd [#allocation6], %s107
          %s109 = sshll.u32 [#allocation5], 4
          %s110 = int_to_ptr.vmem [resolvable:$true] %s109
          %115 = dma.hbm_to_vmem [thread:$0]  %s1, 9216, %s110, [#allocation6], 192, 192, 12
        $region16: #{tpu_custom_call.1} parent=11 // pred_fallthru
          _
      $region12: #{tpu_custom_call.1} parent=5 // pred_fallthru
        _
      %p116 = scmp.lt.s32.totalorder %s15, 2
      // Predicated region
      $region17: #{tpu_custom_call.1} parent=5 // pred_check
        %p117 = pneg %p116
      $region18: #{tpu_custom_call.1} parent=5 // pred_check_branch
        %119 = sbr.rel (%p117) target = $region20
      $region19: #{tpu_custom_call.1} parent=5 // pred_region
        // Predicated region
        $region21: #{tpu_custom_call.1} parent=19 // pred_check
          %p120 = pneg %p35
        $region22: #{tpu_custom_call.1} parent=19 // pred_check_branch
          %122 = sbr.rel (%p120) target = $region24
        $region23: #{tpu_custom_call.1} parent=19 // pred_region
          %s123 = sand.u32 %s25, 1
          %s124 = scalar_lea.sflag [#allocation3], %s123
          %s125 = sand.u32 %s25, 1
          %s126 = smul.addr %s125, 24
          %s127 = scalar_lea.vmem [#allocation2], %s126
          %s129 = ssub.s32 384, 384
          %130 = vsyncadd %s124, %s129
          %s131 = smul.addr %s15, 6
          %s132 = smul.addr %s131, 64
          %s133 = scalar_lea.hbm %s0, %s132
          %s134 = sshll.u32 %s127, 4
          %s135 = int_to_ptr.vmem [resolvable:$true] %s134
          %140 = dma.hbm_to_vmem [thread:$0]  %s133, 384, %s135, %s124, 192, 192, 12
        $region24: #{tpu_custom_call.1} parent=19 // pred_fallthru
          _
      $region20: #{tpu_custom_call.1} parent=5 // pred_fallthru
        _
      %p141 = scmp.le.s32.totalorder 1, %s15
      %p142 = scmp.lt.s32.totalorder %s15, 3
      %p143 = pnand %p141, %p142
      %p144 = pneg %p143
      // Predicated region
      $region25: #{tpu_custom_call.1} parent=5 // pred_check
        _
      $region26: #{tpu_custom_call.1} parent=5 // pred_check_branch
        %146 = sbr.rel (%p143) target = $region28
      $region27: #{tpu_custom_call.1} parent=5 // pred_region
        %s147 = ssub.s32 %s15, 1
        %s148 = sand.u32 %s28, 1
        %s149 = scalar_lea.sflag [#allocation3], %s148
        %s150 = sand.u32 %s28, 1
        %s151 = smul.addr %s150, 24
        %s152 = scalar_lea.vmem [#allocation2], %s151
        // Predicated region
        $region29: #{tpu_custom_call.1} parent=27 // pred_check
          %p153 = pneg %p41
        $region30: #{tpu_custom_call.1} parent=27 // pred_check_branch
          %155 = sbr.rel (%p153) target = $region32
        $region31: #{tpu_custom_call.1} parent=27 // pred_region
          %156 = dma.done %s149, 384
        $region32: #{tpu_custom_call.1} parent=27 // pred_fallthru
          _
        // Predicated region
        $region33: #{tpu_custom_call.1} parent=27 // pred_check
          %p157 = pneg %p62
        $region34: #{tpu_custom_call.1} parent=27 // pred_check_branch
          %159 = sbr.rel (%p157) target = $region36
        $region35: #{tpu_custom_call.1} parent=27 // pred_region
          %160 = dma.done [#allocation6], 9216
        $region36: #{tpu_custom_call.1} parent=27 // pred_fallthru
          _
        %s161 = sand.u32 %s28, 1
        %s162 = scalar_lea.sflag [#allocation3], %s161
        %s163 = sand.u32 %s28, 1
        %s164 = smul.addr %s163, 24
        %s165 = scalar_lea.vmem [#allocation2], %s164
        %p166 = pneg %p41
        %p167 = pneg %p38
        %p168 = pneg %p62
        %p169 = pneg %p59
        %p170 = pneg %p88
        %p171 = pneg %p85
        %s172 = sand.u32 %s75, 1
        %s173 = scalar_lea.sflag [#allocation4], %s172
        %s174 = sand.u32 %s75, 1
        %s175 = smul.addr %s174, 16
        %s176 = scalar_lea.vmem [#allocation7], %s175
        %v178 = vld [vmem:[%s152] sm:$0xff]
        %v179 = vld [vmem:[%s152 + $0x8] sm:$0xf]
        %v180 = vld [vmem:[%s152 + $0xc] sm:$0xff]
        %v181 = vld [vmem:[%s152 + $0x14] sm:$0xf]
        %v182 = vld [vmem:[#allocation5] sm:$0xff]
        %v183 = vld [vmem:[#allocation5 + $0x8] sm:$0xf]
        %v184 = vld [vmem:[#allocation5 + $0xc] sm:$0xff]
        %v185 = vld [vmem:[#allocation5 + $0x14] sm:$0xf]
        %v186 = vld [vmem:[#allocation5 + $0x18] sm:$0xff]
        %v187 = vld [vmem:[#allocation5 + $0x20] sm:$0xf]
        %v188 = vld [vmem:[#allocation5 + $0x24] sm:$0xff]
        %v189 = vld [vmem:[#allocation5 + $0x2c] sm:$0xf]
        %v190 = vld [vmem:[#allocation5 + $0x30] sm:$0xff]
        %v191 = vld [vmem:[#allocation5 + $0x38] sm:$0xf]
        %v192 = vld [vmem:[#allocation5 + $0x3c] sm:$0xff]
        %v193 = vld [vmem:[#allocation5 + $0x44] sm:$0xf]
        %v194 = vld [vmem:[#allocation5 + $0x48] sm:$0xff]
        %v195 = vld [vmem:[#allocation5 + $0x50] sm:$0xf]
        %v196 = vld [vmem:[#allocation5 + $0x54] sm:$0xff]
        %v197 = vld [vmem:[#allocation5 + $0x5c] sm:$0xf]
        %v198 = vld [vmem:[#allocation5 + $0x60] sm:$0xff]
        %v199 = vld [vmem:[#allocation5 + $0x68] sm:$0xf]
        %v200 = vld [vmem:[#allocation5 + $0x6c] sm:$0xff]
        %v201 = vld [vmem:[#allocation5 + $0x74] sm:$0xf]
        %v202 = vld [vmem:[#allocation5 + $0x78] sm:$0xff]
        %v203 = vld [vmem:[#allocation5 + $0x80] sm:$0xf]
        %v204 = vld [vmem:[#allocation5 + $0x84] sm:$0xff]
        %v205 = vld [vmem:[#allocation5 + $0x8c] sm:$0xf]
        %v206 = vld [vmem:[#allocation5 + $0x90] sm:$0xff]
        %v207 = vld [vmem:[#allocation5 + $0x98] sm:$0xf]
        %v208 = vld [vmem:[#allocation5 + $0x9c] sm:$0xff]
        %v209 = vld [vmem:[#allocation5 + $0xa4] sm:$0xf]
        %v210 = vld [vmem:[#allocation5 + $0xa8] sm:$0xff]
        %v211 = vld [vmem:[#allocation5 + $0xb0] sm:$0xf]
        %v212 = vld [vmem:[#allocation5 + $0xb4] sm:$0xff]
        %v213 = vld [vmem:[#allocation5 + $0xbc] sm:$0xf]
        %v214 = vld [vmem:[#allocation5 + $0xc0] sm:$0xff]
        %v215 = vld [vmem:[#allocation5 + $0xc8] sm:$0xf]
        %v216 = vld [vmem:[#allocation5 + $0xcc] sm:$0xff]
        %v217 = vld [vmem:[#allocation5 + $0xd4] sm:$0xf]
        %v218 = vld [vmem:[#allocation5 + $0xd8] sm:$0xff]
        %v219 = vld [vmem:[#allocation5 + $0xe0] sm:$0xf]
        %v220 = vld [vmem:[#allocation5 + $0xe4] sm:$0xff]
        %v221 = vld [vmem:[#allocation5 + $0xec] sm:$0xf]
        %v222 = vld [vmem:[#allocation5 + $0xf0] sm:$0xff]
        %v223 = vld [vmem:[#allocation5 + $0xf8] sm:$0xf]
        %v224 = vld [vmem:[#allocation5 + $0xfc] sm:$0xff]
        %v225 = vld [vmem:[#allocation5 + $0x104] sm:$0xf]
        %v226 = vld [vmem:[#allocation5 + $0x108] sm:$0xff]
        %v227 = vld [vmem:[#allocation5 + $0x110] sm:$0xf]
        %v228 = vld [vmem:[#allocation5 + $0x114] sm:$0xff]
        %v229 = vld [vmem:[#allocation5 + $0x11c] sm:$0xf]
        %v230 = vld [vmem:[#allocation5 + $0x120] sm:$0xff]
        %v231 = vld [vmem:[#allocation5 + $0x128] sm:$0xf]
        %v232 = vld [vmem:[#allocation5 + $0x12c] sm:$0xff]
        %v233 = vld [vmem:[#allocation5 + $0x134] sm:$0xf]
        %v234 = vld [vmem:[#allocation5 + $0x138] sm:$0xff]
        %v235 = vld [vmem:[#allocation5 + $0x140] sm:$0xf]
        %v236 = vld [vmem:[#allocation5 + $0x144] sm:$0xff]
        %v237 = vld [vmem:[#allocation5 + $0x14c] sm:$0xf]
        %v238 = vld [vmem:[#allocation5 + $0x150] sm:$0xff]
        %v239 = vld [vmem:[#allocation5 + $0x158] sm:$0xf]
        %v240 = vld [vmem:[#allocation5 + $0x15c] sm:$0xff]
        %v241 = vld [vmem:[#allocation5 + $0x164] sm:$0xf]
        %v242 = vld [vmem:[#allocation5 + $0x168] sm:$0xff]
        %v243 = vld [vmem:[#allocation5 + $0x170] sm:$0xf]
        %v244 = vld [vmem:[#allocation5 + $0x174] sm:$0xff]
        %v245 = vld [vmem:[#allocation5 + $0x17c] sm:$0xf]
        %v246 = vld [vmem:[#allocation5 + $0x180] sm:$0xff]
        %v247 = vld [vmem:[#allocation5 + $0x188] sm:$0xf]
        %v248 = vld [vmem:[#allocation5 + $0x18c] sm:$0xff]
        %v249 = vld [vmem:[#allocation5 + $0x194] sm:$0xf]
        %v250 = vld [vmem:[#allocation5 + $0x198] sm:$0xff]
        %v251 = vld [vmem:[#allocation5 + $0x1a0] sm:$0xf]
        %v252 = vld [vmem:[#allocation5 + $0x1a4] sm:$0xff]
        %v253 = vld [vmem:[#allocation5 + $0x1ac] sm:$0xf]
        %v254 = vld [vmem:[#allocation5 + $0x1b0] sm:$0xff]
        %v255 = vld [vmem:[#allocation5 + $0x1b8] sm:$0xf]
        %v256 = vld [vmem:[#allocation5 + $0x1bc] sm:$0xff]
        %v257 = vld [vmem:[#allocation5 + $0x1c4] sm:$0xf]
        %v258 = vld [vmem:[#allocation5 + $0x1c8] sm:$0xff]
        %v259 = vld [vmem:[#allocation5 + $0x1d0] sm:$0xf]
        %v260 = vld [vmem:[#allocation5 + $0x1d4] sm:$0xff]
        %v261 = vld [vmem:[#allocation5 + $0x1dc] sm:$0xf]
        %v262 = vld [vmem:[#allocation5 + $0x1e0] sm:$0xff]
        %v263 = vld [vmem:[#allocation5 + $0x1e8] sm:$0xf]
        %v264 = vld [vmem:[#allocation5 + $0x1ec] sm:$0xff]
        %v265 = vld [vmem:[#allocation5 + $0x1f4] sm:$0xf]
        %v266 = vld [vmem:[#allocation5 + $0x1f8] sm:$0xff]
        %v267 = vld [vmem:[#allocation5 + $0x200] sm:$0xf]
        %v268 = vld [vmem:[#allocation5 + $0x204] sm:$0xff]
        %v269 = vld [vmem:[#allocation5 + $0x20c] sm:$0xf]
        %v270 = vld [vmem:[#allocation5 + $0x210] sm:$0xff]
        %v271 = vld [vmem:[#allocation5 + $0x218] sm:$0xf]
        %v272 = vld [vmem:[#allocation5 + $0x21c] sm:$0xff]
        %v273 = vld [vmem:[#allocation5 + $0x224] sm:$0xf]
        %v274 = vld [vmem:[#allocation5 + $0x228] sm:$0xff]
        %v275 = vld [vmem:[#allocation5 + $0x230] sm:$0xf]
        %v276 = vld [vmem:[#allocation5 + $0x234] sm:$0xff]
        %v277 = vld [vmem:[#allocation5 + $0x23c] sm:$0xf]
        %v282 = vunpack.c.l.b16 %v178
        %v283 = vunpack.c.h.b16 %v178
        %v284 = vunpack.c.l.b16 %v179
        %v285 = vunpack.c.l.b16 %v180
        %v286 = vunpack.c.h.b16 %v180
        %v287 = vunpack.c.l.b16 %v181
        %v288 = vpack.c.b16 %v285, %v282
        %v289 = vpack.c.b16 %v286, %v283
        %v290 = vpack.c.b16 %v287, %v284
        %v390 = vunpack.c.l.b16 %v182
        %v391 = vunpack.c.h.b16 %v182
        %v392 = vunpack.c.l.b16 %v183
        %v393 = vunpack.c.l.b16 %v184
        %v394 = vunpack.c.h.b16 %v184
        %v395 = vunpack.c.l.b16 %v185
        %v396 = vunpack.c.l.b16 %v186
        %v397 = vunpack.c.h.b16 %v186
        %v398 = vunpack.c.l.b16 %v187
        %v399 = vunpack.c.l.b16 %v188
        %v400 = vunpack.c.h.b16 %v188
        %v401 = vunpack.c.l.b16 %v189
        %v402 = vunpack.c.l.b16 %v190
        %v403 = vunpack.c.h.b16 %v190
        %v404 = vunpack.c.l.b16 %v191
        %v405 = vunpack.c.l.b16 %v192
        %v406 = vunpack.c.h.b16 %v192
        %v407 = vunpack.c.l.b16 %v193
        %v408 = vunpack.c.l.b16 %v194
        %v409 = vunpack.c.h.b16 %v194
        %v410 = vunpack.c.l.b16 %v195
        %v411 = vunpack.c.l.b16 %v196
        %v412 = vunpack.c.h.b16 %v196
        %v413 = vunpack.c.l.b16 %v197
        %v414 = vunpack.c.l.b16 %v198
        %v415 = vunpack.c.h.b16 %v198
        %v416 = vunpack.c.l.b16 %v199
        %v417 = vunpack.c.l.b16 %v200
        %v418 = vunpack.c.h.b16 %v200
        %v419 = vunpack.c.l.b16 %v201
        %v420 = vunpack.c.l.b16 %v202
        %v421 = vunpack.c.h.b16 %v202
        %v422 = vunpack.c.l.b16 %v203
        %v423 = vunpack.c.l.b16 %v204
        %v424 = vunpack.c.h.b16 %v204
        %v425 = vunpack.c.l.b16 %v205
        %v426 = vunpack.c.l.b16 %v206
        %v427 = vunpack.c.h.b16 %v206
        %v428 = vunpack.c.l.b16 %v207
        %v429 = vunpack.c.l.b16 %v208
        %v430 = vunpack.c.h.b16 %v208
        %v431 = vunpack.c.l.b16 %v209
        %v432 = vunpack.c.l.b16 %v210
        %v433 = vunpack.c.h.b16 %v210
        %v434 = vunpack.c.l.b16 %v211
        %v435 = vunpack.c.l.b16 %v212
        %v436 = vunpack.c.h.b16 %v212
        %v437 = vunpack.c.l.b16 %v213
        %v438 = vunpack.c.l.b16 %v214
        %v439 = vunpack.c.h.b16 %v214
        %v440 = vunpack.c.l.b16 %v215
        %v441 = vunpack.c.l.b16 %v216
        %v442 = vunpack.c.h.b16 %v216
        %v443 = vunpack.c.l.b16 %v217
        %v444 = vunpack.c.l.b16 %v218
        %v445 = vunpack.c.h.b16 %v218
        %v446 = vunpack.c.l.b16 %v219
        %v447 = vunpack.c.l.b16 %v220
        %v448 = vunpack.c.h.b16 %v220
        %v449 = vunpack.c.l.b16 %v221
        %v450 = vunpack.c.l.b16 %v222
        %v451 = vunpack.c.h.b16 %v222
        %v452 = vunpack.c.l.b16 %v223
        %v453 = vunpack.c.l.b16 %v224
        %v454 = vunpack.c.h.b16 %v224
        %v455 = vunpack.c.l.b16 %v225
        %v456 = vunpack.c.l.b16 %v226
        %v457 = vunpack.c.h.b16 %v226
        %v458 = vunpack.c.l.b16 %v227
        %v459 = vunpack.c.l.b16 %v228
        %v460 = vunpack.c.h.b16 %v228
        %v461 = vunpack.c.l.b16 %v229
        %v462 = vunpack.c.l.b16 %v230
        %v463 = vunpack.c.h.b16 %v230
        %v464 = vunpack.c.l.b16 %v231
        %v465 = vunpack.c.l.b16 %v232
        %v466 = vunpack.c.h.b16 %v232
        %v467 = vunpack.c.l.b16 %v233
        %v468 = vunpack.c.l.b16 %v234
        %v469 = vunpack.c.h.b16 %v234
        %v470 = vunpack.c.l.b16 %v235
        %v471 = vunpack.c.l.b16 %v236
        %v472 = vunpack.c.h.b16 %v236
        %v473 = vunpack.c.l.b16 %v237
        %v474 = vunpack.c.l.b16 %v238
        %v475 = vunpack.c.h.b16 %v238
        %v476 = vunpack.c.l.b16 %v239
        %v477 = vunpack.c.l.b16 %v240
        %v478 = vunpack.c.h.b16 %v240
        %v479 = vunpack.c.l.b16 %v241
        %v480 = vunpack.c.l.b16 %v242
        %v481 = vunpack.c.h.b16 %v242
        %v482 = vunpack.c.l.b16 %v243
        %v483 = vunpack.c.l.b16 %v244
        %v484 = vunpack.c.h.b16 %v244
        %v485 = vunpack.c.l.b16 %v245
        %v486 = vunpack.c.l.b16 %v246
        %v487 = vunpack.c.h.b16 %v246
        %v488 = vunpack.c.l.b16 %v247
        %v489 = vunpack.c.l.b16 %v248
        %v490 = vunpack.c.h.b16 %v248
        %v491 = vunpack.c.l.b16 %v249
        %v492 = vunpack.c.l.b16 %v250
        %v493 = vunpack.c.h.b16 %v250
        %v494 = vunpack.c.l.b16 %v251
        %v495 = vunpack.c.l.b16 %v252
        %v496 = vunpack.c.h.b16 %v252
        %v497 = vunpack.c.l.b16 %v253
        %v498 = vunpack.c.l.b16 %v254
        %v499 = vunpack.c.h.b16 %v254
        %v500 = vunpack.c.l.b16 %v255
        %v501 = vunpack.c.l.b16 %v256
        %v502 = vunpack.c.h.b16 %v256
        %v503 = vunpack.c.l.b16 %v257
        %v504 = vunpack.c.l.b16 %v258
        %v505 = vunpack.c.h.b16 %v258
        %v506 = vunpack.c.l.b16 %v259
        %v507 = vunpack.c.l.b16 %v260
        %v508 = vunpack.c.h.b16 %v260
        %v509 = vunpack.c.l.b16 %v261
        %v510 = vunpack.c.l.b16 %v262
        %v511 = vunpack.c.h.b16 %v262
        %v512 = vunpack.c.l.b16 %v263
        %v513 = vunpack.c.l.b16 %v264
        %v514 = vunpack.c.h.b16 %v264
        %v515 = vunpack.c.l.b16 %v265
        %v516 = vunpack.c.l.b16 %v266
        %v517 = vunpack.c.h.b16 %v266
        %v518 = vunpack.c.l.b16 %v267
        %v519 = vunpack.c.l.b16 %v268
        %v520 = vunpack.c.h.b16 %v268
        %v521 = vunpack.c.l.b16 %v269
        %v522 = vunpack.c.l.b16 %v270
        %v523 = vunpack.c.h.b16 %v270
        %v524 = vunpack.c.l.b16 %v271
        %v525 = vunpack.c.l.b16 %v272
        %v526 = vunpack.c.h.b16 %v272
        %v527 = vunpack.c.l.b16 %v273
        %v528 = vunpack.c.l.b16 %v274
        %v529 = vunpack.c.h.b16 %v274
        %v530 = vunpack.c.l.b16 %v275
        %v531 = vunpack.c.l.b16 %v276
        %v532 = vunpack.c.h.b16 %v276
        %v533 = vunpack.c.l.b16 %v277
        %v534 = vpack.c.b16 %v393, %v390
        %v535 = vpack.c.b16 %v394, %v391
        %v536 = vpack.c.b16 %v395, %v392
        %v537 = vpack.c.b16 %v399, %v396
        %v538 = vpack.c.b16 %v400, %v397
        %v539 = vpack.c.b16 %v401, %v398
        %v540 = vpack.c.b16 %v405, %v402
        %v541 = vpack.c.b16 %v406, %v403
        %v542 = vpack.c.b16 %v407, %v404
        %v543 = vpack.c.b16 %v411, %v408
        %v544 = vpack.c.b16 %v412, %v409
        %v545 = vpack.c.b16 %v413, %v410
        %v546 = vpack.c.b16 %v417, %v414
        %v547 = vpack.c.b16 %v418, %v415
        %v548 = vpack.c.b16 %v419, %v416
        %v549 = vpack.c.b16 %v423, %v420
        %v550 = vpack.c.b16 %v424, %v421
        %v551 = vpack.c.b16 %v425, %v422
        %v552 = vpack.c.b16 %v429, %v426
        %v553 = vpack.c.b16 %v430, %v427
        %v554 = vpack.c.b16 %v431, %v428
        %v555 = vpack.c.b16 %v435, %v432
        %v556 = vpack.c.b16 %v436, %v433
        %v557 = vpack.c.b16 %v437, %v434
        %v558 = vpack.c.b16 %v441, %v438
        %v559 = vpack.c.b16 %v442, %v439
        %v560 = vpack.c.b16 %v443, %v440
        %v561 = vpack.c.b16 %v447, %v444
        %v562 = vpack.c.b16 %v448, %v445
        %v563 = vpack.c.b16 %v449, %v446
        %v564 = vpack.c.b16 %v453, %v450
        %v565 = vpack.c.b16 %v454, %v451
        %v566 = vpack.c.b16 %v455, %v452
        %v567 = vpack.c.b16 %v459, %v456
        %v568 = vpack.c.b16 %v460, %v457
        %v569 = vpack.c.b16 %v461, %v458
        %v570 = vpack.c.b16 %v465, %v462
        %v571 = vpack.c.b16 %v466, %v463
        %v572 = vpack.c.b16 %v467, %v464
        %v573 = vpack.c.b16 %v471, %v468
        %v574 = vpack.c.b16 %v472, %v469
        %v575 = vpack.c.b16 %v473, %v470
        %v576 = vpack.c.b16 %v477, %v474
        %v577 = vpack.c.b16 %v478, %v475
        %v578 = vpack.c.b16 %v479, %v476
        %v579 = vpack.c.b16 %v483, %v480
        %v580 = vpack.c.b16 %v484, %v481
        %v581 = vpack.c.b16 %v485, %v482
        %v582 = vpack.c.b16 %v489, %v486
        %v583 = vpack.c.b16 %v490, %v487
        %v584 = vpack.c.b16 %v491, %v488
        %v585 = vpack.c.b16 %v495, %v492
        %v586 = vpack.c.b16 %v496, %v493
        %v587 = vpack.c.b16 %v497, %v494
        %v588 = vpack.c.b16 %v501, %v498
        %v589 = vpack.c.b16 %v502, %v499
        %v590 = vpack.c.b16 %v503, %v500
        %v591 = vpack.c.b16 %v507, %v504
        %v592 = vpack.c.b16 %v508, %v505
        %v593 = vpack.c.b16 %v509, %v506
        %v594 = vpack.c.b16 %v513, %v510
        %v595 = vpack.c.b16 %v514, %v511
        %v596 = vpack.c.b16 %v515, %v512
        %v597 = vpack.c.b16 %v519, %v516
        %v598 = vpack.c.b16 %v520, %v517
        %v599 = vpack.c.b16 %v521, %v518
        %v600 = vpack.c.b16 %v525, %v522
        %v601 = vpack.c.b16 %v526, %v523
        %v602 = vpack.c.b16 %v527, %v524
        %v603 = vpack.c.b16 %v531, %v528
        %v604 = vpack.c.b16 %v532, %v529
        %v605 = vpack.c.b16 %v533, %v530
        %678 = vmatprep.subr.bf16.mxu0 %v535
        %679 = vmatpush1.bf16.msra.mxu0 %v534
        %680 = vmatprep.subr.bf16.mxu0 %v538
        %681 = vmatpush1.bf16.msra.mxu0 %v537
        %682 = vmatprep.subr.bf16.mxu0 %v541
        %683 = vmatpush1.bf16.msra.mxu0 %v540
        %684 = vmatprep.subr.bf16.mxu0 %v544
        %685 = vmatpush1.bf16.msra.mxu0 %v543
        %686 = vmatprep.subr.bf16.mxu0 %v547
        %687 = vmatpush1.bf16.msra.mxu0 %v546
        %688 = vmatprep.subr.bf16.mxu0 %v550
        %689 = vmatpush1.bf16.msra.mxu0 %v549
        %690 = vmatprep.subr.bf16.mxu0 %v553
        %691 = vmatpush1.bf16.msra.mxu0 %v552
        %692 = vmatprep.subr.bf16.mxu0 %v556
        %693 = vmatpush1.bf16.msra.mxu0 %v555
        %694 = vmatprep.subr.bf16.mxu0 %v559
        %695 = vmatpush1.bf16.msra.mxu0 %v558
        %696 = vmatprep.subr.bf16.mxu0 %v562
        %697 = vmatpush1.bf16.msra.mxu0 %v561
        %698 = vmatprep.subr.bf16.mxu0 %v565
        %699 = vmatpush1.bf16.msra.mxu0 %v564
        %700 = vmatprep.subr.bf16.mxu0 %v568
        %701 = vmatpush1.bf16.msra.mxu0 %v567
        %702 = vmatprep.subr.bf16.mxu0 %v571
        %703 = vmatpush1.bf16.msra.mxu0 %v570
        %704 = vmatprep.subr.bf16.mxu0 %v574
        %705 = vmatpush1.bf16.msra.mxu0 %v573
        %706 = vmatprep.subr.bf16.mxu0 %v577
        %707 = vmatpush1.bf16.msra.mxu0 %v576
        %708 = vmatprep.subr.bf16.mxu0 %v580
        %709 = vmatpush1.bf16.msra.mxu0 %v579
        %710 = vmatprep.mubr.bf16.mxu0 %v289
        %711 = vmatmul.mubr.bf16.gmra.mrb[0].mxu0 %v288
        %v712 = vpop.f32.mrb[0].mxu0
        %v713 = vadd.f32 0.0, %v712
        %v714 = vpop.f32.mrb[0].mxu0
        %v715 = vadd.f32 0.0, %v714
        %v716 = vpop.f32.mrb[0].mxu0
        %v717 = vadd.f32 0.0, %v716
        %v718 = vpop.f32.mrb[0].mxu0
        %v719 = vadd.f32 0.0, %v718
        %720 = vdwg.mxu0
        %721 = vmatprep.subr.bf16.mxu0 %v583
        %722 = vmatpush1.bf16.msra.mxu0 %v582
        %723 = vmatprep.subr.bf16.mxu0 %v586
        %724 = vmatpush1.bf16.msra.mxu0 %v585
        %725 = vmatprep.subr.bf16.mxu0 %v589
        %726 = vmatpush1.bf16.msra.mxu0 %v588
        %727 = vmatprep.subr.bf16.mxu0 %v592
        %728 = vmatpush1.bf16.msra.mxu0 %v591
        %729 = vmatprep.subr.bf16.mxu0 %v595
        %730 = vmatpush1.bf16.msra.mxu0 %v594
        %731 = vmatprep.subr.bf16.mxu0 %v598
        %732 = vmatpush1.bf16.msra.mxu0 %v597
        %733 = vmatprep.subr.bf16.mxu0 %v601
        %734 = vmatpush1.bf16.msra.mxu0 %v600
        %735 = vmatprep.subr.bf16.mxu0 %v604
        %736 = vmatpush1.bf16.msra.mxu0 %v603
        %737 = vmatprep.subr.bf16.mxu0 0
        %738 = vmatpush1.bf16.msra.mxu0 0
        %739 = vmatprep.subr.bf16.mxu0 0
        %740 = vmatpush1.bf16.msra.mxu0 0
        %741 = vmatprep.subr.bf16.mxu0 0
        %742 = vmatpush1.bf16.msra.mxu0 0
        %743 = vmatprep.subr.bf16.mxu0 0
        %744 = vmatpush1.bf16.msra.mxu0 0
        %745 = vmatprep.subr.bf16.mxu0 0
        %746 = vmatpush1.bf16.msra.mxu0 0
        %747 = vmatprep.subr.bf16.mxu0 0
        %748 = vmatpush1.bf16.msra.mxu0 0
        %749 = vmatprep.subr.bf16.mxu0 0
        %750 = vmatpush1.bf16.msra.mxu0 0
        %751 = vmatprep.subr.bf16.mxu0 0
        %752 = vmatpush1.bf16.msra.mxu0 0
        %753 = vmatprep.mubr.bf16.mxu0 0
        %754 = vmatmul.mubr.bf16.gmra.mrb[0].mxu0 %v290
        %v755 = vpop.f32.mrb[0].mxu0
        %v756 = vadd.f32 %v713, %v755
        %v757 = vpop.f32.mrb[0].mxu0
        %v758 = vadd.f32 %v715, %v757
        %v759 = vpop.f32.mrb[0].mxu0
        %v760 = vadd.f32 %v717, %v759
        %v761 = vpop.f32.mrb[0].mxu0
        %v762 = vadd.f32 %v719, %v761
        %763 = vdwg.mxu0
        %764 = vmatprep.subr.bf16.mxu0 0
        %765 = vmatpush1.bf16.msra.mxu0 %v536
        %766 = vmatprep.subr.bf16.mxu0 0
        %767 = vmatpush1.bf16.msra.mxu0 %v539
        %768 = vmatprep.subr.bf16.mxu0 0
        %769 = vmatpush1.bf16.msra.mxu0 %v542
        %770 = vmatprep.subr.bf16.mxu0 0
        %771 = vmatpush1.bf16.msra.mxu0 %v545
        %772 = vmatprep.subr.bf16.mxu0 0
        %773 = vmatpush1.bf16.msra.mxu0 %v548
        %774 = vmatprep.subr.bf16.mxu0 0
        %775 = vmatpush1.bf16.msra.mxu0 %v551
        %776 = vmatprep.subr.bf16.mxu0 0
        %777 = vmatpush1.bf16.msra.mxu0 %v554
        %778 = vmatprep.subr.bf16.mxu0 0
        %779 = vmatpush1.bf16.msra.mxu0 %v557
        %780 = vmatprep.subr.bf16.mxu0 0
        %781 = vmatpush1.bf16.msra.mxu0 %v560
        %782 = vmatprep.subr.bf16.mxu0 0
        %783 = vmatpush1.bf16.msra.mxu0 %v563
        %784 = vmatprep.subr.bf16.mxu0 0
        %785 = vmatpush1.bf16.msra.mxu0 %v566
        %786 = vmatprep.subr.bf16.mxu0 0
        %787 = vmatpush1.bf16.msra.mxu0 %v569
        %788 = vmatprep.subr.bf16.mxu0 0
        %789 = vmatpush1.bf16.msra.mxu0 %v572
        %790 = vmatprep.subr.bf16.mxu0 0
        %791 = vmatpush1.bf16.msra.mxu0 %v575
        %792 = vmatprep.subr.bf16.mxu0 0
        %793 = vmatpush1.bf16.msra.mxu0 %v578
        %794 = vmatprep.subr.bf16.mxu0 0
        %795 = vmatpush1.bf16.msra.mxu0 %v581
        %796 = vmatprep.mubr.bf16.mxu0 %v289
        %797 = vmatmul.mubr.bf16.gmra.mrb[0].mxu0 %v288
        %v798 = vpop.f32.mrb[0].mxu0
        %v799 = vadd.f32 0.0, %v798
        %v800 = vpop.f32.mrb[0].mxu0
        %v801 = vpop.f32.mrb[0].mxu0
        %v802 = vadd.f32 0.0, %v801
        %v803 = vpop.f32.mrb[0].mxu0
        %804 = vdwg.mxu0
        %805 = vmatprep.subr.bf16.mxu0 0
        %806 = vmatpush1.bf16.msra.mxu0 %v584
        %807 = vmatprep.subr.bf16.mxu0 0
        %808 = vmatpush1.bf16.msra.mxu0 %v587
        %809 = vmatprep.subr.bf16.mxu0 0
        %810 = vmatpush1.bf16.msra.mxu0 %v590
        %811 = vmatprep.subr.bf16.mxu0 0
        %812 = vmatpush1.bf16.msra.mxu0 %v593
        %813 = vmatprep.subr.bf16.mxu0 0
        %814 = vmatpush1.bf16.msra.mxu0 %v596
        %815 = vmatprep.subr.bf16.mxu0 0
        %816 = vmatpush1.bf16.msra.mxu0 %v599
        %817 = vmatprep.subr.bf16.mxu0 0
        %818 = vmatpush1.bf16.msra.mxu0 %v602
        %819 = vmatprep.subr.bf16.mxu0 0
        %820 = vmatpush1.bf16.msra.mxu0 %v605
        %821 = vmatprep.subr.bf16.mxu0 0
        %822 = vmatpush1.bf16.msra.mxu0 0
        %823 = vmatprep.subr.bf16.mxu0 0
        %824 = vmatpush1.bf16.msra.mxu0 0
        %825 = vmatprep.subr.bf16.mxu0 0
        %826 = vmatpush1.bf16.msra.mxu0 0
        %827 = vmatprep.subr.bf16.mxu0 0
        %828 = vmatpush1.bf16.msra.mxu0 0
        %829 = vmatprep.subr.bf16.mxu0 0
        %830 = vmatpush1.bf16.msra.mxu0 0
        %831 = vmatprep.subr.bf16.mxu0 0
        %832 = vmatpush1.bf16.msra.mxu0 0
        %833 = vmatprep.subr.bf16.mxu0 0
        %834 = vmatpush1.bf16.msra.mxu0 0
        %835 = vmatprep.subr.bf16.mxu0 0
        %836 = vmatpush1.bf16.msra.mxu0 0
        %837 = vmatprep.mubr.bf16.mxu0 0
        %838 = vmatmul.mubr.bf16.gmra.mrb[0].mxu0 %v290
        %v839 = vpop.f32.mrb[0].mxu0
        %v840 = vadd.f32 %v799, %v839
        %v841 = vpop.f32.mrb[0].mxu0
        %v842 = vpop.f32.mrb[0].mxu0
        %v843 = vadd.f32 %v802, %v842
        %v844 = vpop.f32.mrb[0].mxu0
        %845 = vdwg.mxu0
        %v846 = vpack.c.bf16 %v760, %v756
        %v847 = vpack.c.bf16 %v762, %v758
        %v848 = vpack.c.bf16 %v843, %v840
        %849 = vmatprep.subr.bf16.mxu0 0
        %850 = vmatpush1.bf16.xpose.msra.mxu0 %v847
        %851 = vmatprep.subr.bf16.mxu0 0
        %852 = vmatpush1.bf16.xpose.msra.mxu0 0
        %853 = vmatprep.subr.bf16.mxu0 0
        %854 = vmatpush1.bf16.xpose.msra.mxu0 0
        %855 = vmatprep.subr.bf16.mxu0 0
        %856 = vmatpush1.bf16.xpose.msra.mxu0 0
        %857 = vmatprep.subr.bf16.mxu0 0
        %858 = vmatpush1.bf16.xpose.msra.mxu0 0
        %859 = vmatprep.subr.bf16.mxu0 0
        %860 = vmatpush1.bf16.xpose.msra.mxu0 0
        %861 = vmatprep.subr.bf16.mxu0 0
        %862 = vmatpush1.bf16.xpose.msra.mxu0 0
        %863 = vmatprep.subr.bf16.mxu0 0
        %864 = vmatpush1.bf16.xpose.msra.mxu0 0
        %865 = vmatprep.subr.bf16.mxu0 0
        %866 = vmatpush1.bf16.xpose.msra.mxu0 0
        %867 = vmatprep.subr.bf16.mxu0 0
        %868 = vmatpush1.bf16.xpose.msra.mxu0 0
        %869 = vmatprep.subr.bf16.mxu0 0
        %870 = vmatpush1.bf16.xpose.msra.mxu0 0
        %871 = vmatprep.subr.bf16.mxu0 0
        %872 = vmatpush1.bf16.xpose.msra.mxu0 0
        %873 = vmatprep.subr.bf16.mxu0 0
        %874 = vmatpush1.bf16.xpose.msra.mxu0 0
        %875 = vmatprep.subr.bf16.mxu0 0
        %876 = vmatpush1.bf16.xpose.msra.mxu0 0
        %877 = vmatprep.subr.bf16.mxu0 0
        %878 = vmatpush1.bf16.xpose.msra.mxu0 0
        %879 = vmatprep.subr.bf16.mxu0 0
        %880 = vmatpush1.bf16.xpose.msra.mxu0 0
        %881 = vmatprep.mubr.bf16.mxu0 0
        %882 = vmatmul.mubr.bf16.gmra.mrb[0].mxu0 %v846
        %v883 = vpop.f32.mrb[0].mxu0
        %v884 = vadd.f32 0.0, %v883
        %v885 = vpop.f32.mrb[0].mxu0
        %v886 = vpop.f32.mrb[0].mxu0
        %v887 = vadd.f32 0.0, %v886
        %v888 = vpop.f32.mrb[0].mxu0
        %889 = vdwg.mxu0
        %v890 = vlaneseq
        %v891 = vshrl.u32 %v890, 7
        %v892 = vadd.s32 %v891, 8
        %v893 = vlaneseq
        %v894 = vand.u32 %v893, 127
        %vm895 = vcmp.le.s32.totalorder %v894, %v891
        %vm896 = vcmp.le.s32.totalorder %v894, %v892
        %v897 = vsel %vm895, %v884, -1e+30
        %v898 = vsel %vm896, %v887, -1e+30
        %vm899 = vcmask 130048
        %v900 = vsel %vm899, %v897, -inf
        %901 = vmax.xlane.f32.xlu0 %v900
        %v902 = vpop.xlane.xlu0 %901
        %v903 = vsel %vm899, %v898, -inf
        %904 = vmax.xlane.f32.xlu0 %v903
        %v905 = vpop.xlane.xlu0 %904
        %v906 = vsub.f32 %v897, %v902
        %v907 = vsub.f32 %v898, %v905
        %v908 = vmul.f32 %v906, 1.442695
        %v909 = vpow.pop %v908
        %v910 = vmul.f32 %v907, 1.442695
        %v911 = vpow.pop %v910
        %v912 = vsel %vm899, %v909, 0.0
        %913 = vadd.xlane.f32.xlu0 %v912
        %v914 = vpop.xlane.xlu0 %913
        %v915 = vsel %vm899, %v911, 0.0
        %916 = vadd.xlane.f32.xlu0 %v915
        %v917 = vpop.xlane.xlu0 %916
        %v918 = vpack.c.bf16 %v911, %v909
        %v920 = vsel %vm899, %v918, 0
        %922 = vmatprep.subr.bf16.mxu0 0
        %923 = vmatpush1.bf16.msra.mxu0 %v848
        %924 = vmatprep.subr.bf16.mxu0 0
        %925 = vmatpush1.bf16.msra.mxu0 0
        %926 = vmatprep.subr.bf16.mxu0 0
        %927 = vmatpush1.bf16.msra.mxu0 0
        %928 = vmatprep.subr.bf16.mxu0 0
        %929 = vmatpush1.bf16.msra.mxu0 0
        %930 = vmatprep.subr.bf16.mxu0 0
        %931 = vmatpush1.bf16.msra.mxu0 0
        %932 = vmatprep.subr.bf16.mxu0 0
        %933 = vmatpush1.bf16.msra.mxu0 0
        %934 = vmatprep.subr.bf16.mxu0 0
        %935 = vmatpush1.bf16.msra.mxu0 0
        %936 = vmatprep.subr.bf16.mxu0 0
        %937 = vmatpush1.bf16.msra.mxu0 0
        %938 = vmatprep.subr.bf16.mxu0 0
        %939 = vmatpush1.bf16.msra.mxu0 0
        %940 = vmatprep.subr.bf16.mxu0 0
        %941 = vmatpush1.bf16.msra.mxu0 0
        %942 = vmatprep.subr.bf16.mxu0 0
        %943 = vmatpush1.bf16.msra.mxu0 0
        %944 = vmatprep.subr.bf16.mxu0 0
        %945 = vmatpush1.bf16.msra.mxu0 0
        %946 = vmatprep.subr.bf16.mxu0 0
        %947 = vmatpush1.bf16.msra.mxu0 0
        %948 = vmatprep.subr.bf16.mxu0 0
        %949 = vmatpush1.bf16.msra.mxu0 0
        %950 = vmatprep.subr.bf16.mxu0 0
        %951 = vmatpush1.bf16.msra.mxu0 0
        %952 = vmatprep.subr.bf16.mxu0 0
        %953 = vmatpush1.bf16.msra.mxu0 0
        %954 = vmatprep.mubr.bf16.mxu0 0
        %955 = vmatmul.mubr.bf16.gmra.mrb[0].mxu0 %v920
        %v956 = vpop.f32.mrb[0].mxu0
        %v957 = vadd.f32 0.0, %v956
        %v958 = vpop.f32.mrb[0].mxu0
        %v959 = vpop.f32.mrb[0].mxu0
        %v960 = vadd.f32 0.0, %v959
        %v961 = vpop.f32.mrb[0].mxu0
        %962 = vdwg.mxu0
        %v963 = vrcp.pop %v914
        %v964 = vrcp.pop %v917
        %v965 = vmul.f32 %v957, %v963
        %v966 = vmul.f32 %v960, %v964
        %967 = vst [vmem:[%s176] sm:$0xff] %v965
        %968 = vst [vmem:[%s176 + $0x8] sm:$0xff] %v966
        %s969 = sand.u32 %s75, 1
        %s970 = scalar_lea.sflag [#allocation4], %s969
        %s971 = sand.u32 %s75, 1
        %s972 = smul.addr %s971, 16
        %s973 = scalar_lea.vmem [#allocation7], %s972
        // Predicated region
        $region37: #{tpu_custom_call.1} parent=27 // pred_check
          %p974 = pneg %p85
        $region38: #{tpu_custom_call.1} parent=27 // pred_check_branch
          %976 = sbr.rel (%p974) target = $region40
        $region39: #{tpu_custom_call.1} parent=27 // pred_region
          %s978 = ssub.s32 256, 256
          %979 = vsyncadd %s970, %s978
          %s980 = smul.addr %s20, 2
          %s981 = smul.addr %s980, 128
          %s982 = scalar_lea.hbm %s2, %s981
          %s983 = sshll.u32 %s973, 4
          %s984 = int_to_ptr.vmem [resolvable:$true] %s983
          %989 = dma.vmem_to_hbm [thread:$0]  %s984, 256, %s982, %s970, 128, 128, 8
        $region40: #{tpu_custom_call.1} parent=27 // pred_fallthru
          _
      $region28: #{tpu_custom_call.1} parent=5 // pred_fallthru
        _
      %p990 = scmp.le.s32.totalorder 2, %s15
      // Predicated region
      $region41: #{tpu_custom_call.1} parent=5 // pred_check
        %p991 = pneg %p990
      $region42: #{tpu_custom_call.1} parent=5 // pred_check_branch
        %993 = sbr.rel (%p991) target = $region44
      $region43: #{tpu_custom_call.1} parent=5 // pred_region
        %s994 = ssub.s32 %s15, 2
        // Predicated region
        $region45: #{tpu_custom_call.1} parent=43 // pred_check
          %p995 = pneg %p91
        $region46: #{tpu_custom_call.1} parent=43 // pred_check_branch
          %997 = sbr.rel (%p995) target = $region48
        $region47: #{tpu_custom_call.1} parent=43 // pred_region
          %s998 = sand.u32 %s76, 1
          %s999 = scalar_lea.sflag [#allocation4], %s998
          %s1000 = sand.u32 %s76, 1
          %s1001 = smul.addr %s1000, 16
          %s1002 = scalar_lea.vmem [#allocation7], %s1001
          %1003 = dma.done %s999, 256
        $region48: #{tpu_custom_call.1} parent=43 // pred_fallthru
          _
      $region44: #{tpu_custom_call.1} parent=5 // pred_fallthru
        _
    $region6: #{tpu_custom_call.1} parent=1 // loop_footer
      %s19 = sadd.s32 1, %s15
    $region7: #{tpu_custom_call.1} parent=1 // loop_footer_branch
      %14 = sbr.rel target = $region3
    $region8: #{tpu_custom_call.1} parent=1 // loop_exit
      _
    %1004 = vsyncpa [#allocation3], 1
    %s1005 = scalar_lea.sflag [#allocation3], 1
    %1006 = vsyncpa %s1005, 1
    %1007 = vsyncpa [#allocation6], 1
    %1008 = vsyncpa [#allocation4], 1
    %s1009 = scalar_lea.sflag [#allocation4], 1
    %1010 = vsyncpa %s1009, 1

</llo_original>
